<compile_context>
chip_gen: v5e
topology: v5e:2x2
jax: 0.10.0
libtpu: 0.0.40
codegen_flags: <defaults>
</compile_context>

<pallas_src>
import jax
import jax.numpy as jnp
from jax.experimental import pallas as pl
from jax.experimental.pallas import tpu as pltpu

_LANE_MAX = 4096                        # widest lane (last) dim we try, multiple of 128
_TARGET_TILE_BYTES = 2 * 1024 * 1024    # ~2 MiB per input block (safe on v5e/v6e/v7x)
_MAX_SINGLE_BLOCK_BYTES = 4 * 1024 * 1024
_VMEM_LIMIT_BYTES = 32 * 1024 * 1024


def _add_noise_kernel(x_ref, n_ref, o_ref):
    # Elementwise hot path: out = x + noise (one vadd per vreg; DMA-bound).
    o_ref[...] = x_ref[...] + n_ref[...]


def _tiled_add_2d(x2d, n2d, tile_rows):
    rows, lane = x2d.shape
    grid = rows // tile_rows
    # TODO(synk): optionally pass input_output_aliases={0: 0} when the caller
    # donates x, to avoid allocating a third full-size HBM buffer.
    return pl.pallas_call(
        _add_noise_kernel,
        out_shape=jax.ShapeDtypeStruct((rows, lane), x2d.dtype),
        grid_spec=pltpu.PrefetchScalarGridSpec(
            num_scalar_prefetch=0,
            grid=(grid,),
            in_specs=[
                pl.BlockSpec((tile_rows, lane), lambda i: (i, 0)),
                pl.BlockSpec((tile_rows, lane), lambda i: (i, 0)),
            ],
            out_specs=pl.BlockSpec((tile_rows, lane), lambda i: (i, 0)),
        ),
        compiler_params=pltpu.CompilerParams(
            dimension_semantics=("parallel",),
            vmem_limit_bytes=_VMEM_LIMIT_BYTES,
        ),
    )(x2d, n2d)


def _exact_factorization(total, itemsize):
    """Return (rows, lane, tile_rows) that tile `total` exactly, or None."""
    lane_hi = min(_LANE_MAX, total) // 128 * 128
    lane = None
    for cand in range(lane_hi, 0, -128):
        if total % cand == 0:
            lane = cand
            break
    if lane is None:
        return None
    rows = total // lane
    target_rows = max(8, (_TARGET_TILE_BYTES // (lane * itemsize)) // 8 * 8)
    limit = min(rows, target_rows)
    tile_rows = None
    for cand in range(limit - (limit % 8), 7, -8):
        if rows % cand == 0:
            tile_rows = cand
            break
    if tile_rows is None:
        # No multiple-of-8 divisor of rows: a block whose row dim equals the
        # full array dim is always legal; accept it if it is small enough.
        if rows * lane * itemsize <= _MAX_SINGLE_BLOCK_BYTES:
            tile_rows = rows
        else:
            return None
    return rows, lane, tile_rows


def noise_layer_forward(x, noise):
    """out = x + noise (fixed buffer), via a Pallas TPU kernel."""
    assert x.shape == noise.shape, "noise buffer must match input shape"
    if noise.dtype != x.dtype:
        noise = noise.astype(x.dtype)

    orig_shape = x.shape
    total = int(x.size)
    itemsize = x.dtype.itemsize

    fact = _exact_factorization(total, itemsize)
    if fact is not None:
        # Common path: pure reshapes, no padding copies.
        rows, lane, tile_rows = fact
        x2d = jnp.reshape(x, (rows, lane))
        n2d = jnp.reshape(noise, (rows, lane))
        out2d = _tiled_add_2d(x2d, n2d, tile_rows)
        return jnp.reshape(out2d, orig_shape)

    # Fallback for awkward element counts (no multiple-of-128 factor): pad the
    # flat view to a whole number of (tile_rows, lane) blocks.
    lane = 1024 if total >= 1024 else 128
    rows = pl.cdiv(total, lane)
    tile_rows = max(8, (_TARGET_TILE_BYTES // (lane * itemsize)) // 8 * 8)
    tile_rows = min(tile_rows, pl.cdiv(rows, 8) * 8)
    padded_rows = pl.cdiv(rows, tile_rows) * tile_rows
    pad = padded_rows * lane - total
    xf = jnp.pad(jnp.reshape(x, (-1,)), (0, pad))
    nf = jnp.pad(jnp.reshape(noise, (-1,)), (0, pad))
    out2d = _tiled_add_2d(
        jnp.reshape(xf, (padded_rows, lane)),
        jnp.reshape(nf, (padded_rows, lane)),
        tile_rows,
    )
    return jnp.reshape(jnp.reshape(out2d, (-1,))[:total], orig_shape)


def make_noise_buffer(shape, stddev, seed=42, dtype=jnp.float32):
    # Deterministic stand-in for torch.manual_seed(seed); torch.randn(shape)*stddev.
    key = jax.random.PRNGKey(seed)
    return (jax.random.normal(key, shape, dtype=dtype) * stddev).astype(dtype)


if __name__ == "__main__":
    # Small NCHW shape consistent with a conv-style input.
    shape = (2, 4, 16, 16)
    stddev = 0.1

    noise = make_noise_buffer(shape, stddev, seed=42)
    x = jax.random.normal(jax.random.PRNGKey(0), shape, dtype=jnp.float32)

    out = jax.block_until_ready(noise_layer_forward(x, noise))
    ref = x + noise
    assert out.shape == shape
    assert jnp.allclose(out, ref, atol=1e-6), "mismatch vs reference"

    # Exercise the wide-lane exact path and the padded fallback path too.
    for extra_shape in [(4, 8, 32, 128), (3, 5, 7, 11)]:
        n2 = make_noise_buffer(extra_shape, stddev, seed=42)
        x2 = jax.random.normal(jax.random.PRNGKey(1), extra_shape, dtype=jnp.float32)
        o2 = jax.block_until_ready(noise_layer_forward(x2, n2))
        assert jnp.allclose(o2, x2 + n2, atol=1e-6), "mismatch vs reference"

    print("KERNEL_OK")
</pallas_src>

<mosaic_0001>
module attributes {stable_mosaic.version = 11 : i64} {
  func.func @_add_noise_kernel(%arg0: i32, %arg1: memref<1x2048xf32, #tpu.memory_space<vmem>>, %arg2: memref<1x2048xf32, #tpu.memory_space<vmem>>, %arg3: memref<1x2048xf32, #tpu.memory_space<vmem>>) attributes {dimension_semantics = [#tpu.dimension_semantics<parallel>], iteration_bounds = array<i64: 1>, scalar_prefetch = 0 : i64, scratch_operands = 0 : i64, tpu.core_type = #tpu.core_type<tc>, window_params = [{transform_indices = @transform_0, window_bounds = array<i64: 1, 2048>}, {transform_indices = @transform_1, window_bounds = array<i64: 1, 2048>}, {transform_indices = @transform_2, window_bounds = array<i64: 1, 2048>}]} {
    %c0 = arith.constant 0 : index
    %c0_0 = arith.constant 0 : index
    %0 = vector.load %arg1[%c0, %c0_0] : memref<1x2048xf32, #tpu.memory_space<vmem>>, vector<1x2048xf32>
    %c0_1 = arith.constant 0 : index
    %c0_2 = arith.constant 0 : index
    %1 = vector.load %arg2[%c0_1, %c0_2] : memref<1x2048xf32, #tpu.memory_space<vmem>>, vector<1x2048xf32>
    %2 = arith.addf %0, %1 : vector<1x2048xf32>
    %c0_3 = arith.constant 0 : index
    %c0_4 = arith.constant 0 : index
    %3 = vector.load %arg3[%c0_3, %c0_4] : memref<1x2048xf32, #tpu.memory_space<vmem>>, vector<1x2048xf32>
    tpu.vector_store %arg3[%c0_3, %c0_4], %2 {strides = array<i32>} : memref<1x2048xf32, #tpu.memory_space<vmem>>, vector<1x2048xf32>,
    return
  }
  func.func @transform_0(%arg0: i32) -> (i32, i32) {
    %c0_i32 = arith.constant 0 : i32
    %c0_i32_0 = arith.constant 0 : i32
    return %arg0, %c0_i32 : i32, i32
  }
  func.func @transform_1(%arg0: i32) -> (i32, i32) {
    %c0_i32 = arith.constant 0 : i32
    %c0_i32_0 = arith.constant 0 : i32
    return %arg0, %c0_i32 : i32, i32
  }
  func.func @transform_2(%arg0: i32) -> (i32, i32) {
    %c0_i32 = arith.constant 0 : i32
    %c0_i32_0 = arith.constant 0 : i32
    return %arg0, %c0_i32 : i32, i32
  }
}

</mosaic_0001>

<llo_original>
// kernel: tpu_custom_call.1
$region0: #{tpu_custom_call.1}
  #allocation0 [shape = 'u32[]', space=smem, size = 0x4, offset = 0x4, fixed_abs, tag = 'smem constant byte address 0x4 - core index']
  #allocation1 [shape = 'u32[72,128]{1,0:T(1,128)}', space=vmem, size = 0x9000, scoped, tag = 'internal scratch']
  %s0 = inlined_call_operand.hbm [shape: f32[1,2048], index: 0, kind: input, shape index: {}]
  %s1 = inlined_call_operand.hbm [shape: f32[1,2048], index: 1, kind: input, shape index: {}]
  %s2 = inlined_call_operand.hbm [shape: f32[1,2048], index: 2, kind: output, shape index: {}]
  %s3 = sld [smem:[#allocation0]]
  $region26: #{tpu_custom_call.1} parent=0
    _
  %s5 = ssub.s32 1, %s3
  %s6 = scalar_select 0, %s5, %s3
  $region1: #{tpu_custom_call.1} parent=0
    #allocation2 [shape = 'u8[8192]{0}', space=vmem, size = 0x2000, scoped, tag = 'input window, operand 0, single buffered']
    #allocation3 [shape = 's32[1]{0}', space=sflag, size = 0x4, scoped, tag = 'scoped memory for tpu_custom_call.1']
    #allocation4 [shape = 's32[1]{0}', space=sflag, size = 0x4, scoped, tag = 'scoped memory for tpu_custom_call.1']
    #allocation5 [shape = 'u8[8192]{0}', space=vmem, size = 0x2000, scoped, tag = 'input window, operand 1, single buffered']
    #allocation6 [shape = 's32[1]{0}', space=sflag, size = 0x4, scoped, tag = 'scoped memory for tpu_custom_call.1']
    #allocation7 [shape = 'u8[8192]{0}', space=vmem, size = 0x2000, scoped, tag = 'output window, operand 0, single buffered']
    %7 = vsyncpa [#allocation3], 0
    %8 = vsyncpa [#allocation6], 0
    %9 = vsyncpa [#allocation4], 0
    // Predicated region
    $region2: #{tpu_custom_call.1} parent=1 // pred_check
      _
    $region3: #{tpu_custom_call.1} parent=1 // pred_check_branch
      %11 = sbr.rel (0) target = $region5
    $region4: #{tpu_custom_call.1} parent=1 // pred_region
      %13 = vsyncadd [#allocation3], 0
      %s15 = sshll.u32 %s0, 4
      %s16 = int_to_ptr.hbm [resolvable:$true] %s15
      %s17 = sshll.u32 [#allocation2], 4
      %s18 = int_to_ptr.vmem [resolvable:$true] %s17
      %20 = dma.hbm_to_vmem [thread:$0]  %s16, 256, %s18, [#allocation3]
    $region5: #{tpu_custom_call.1} parent=1 // pred_fallthru
      _
    // Predicated region
    $region6: #{tpu_custom_call.1} parent=1 // pred_check
      _
    $region7: #{tpu_custom_call.1} parent=1 // pred_check_branch
      %22 = sbr.rel (0) target = $region9
    $region8: #{tpu_custom_call.1} parent=1 // pred_region
      %24 = vsyncadd [#allocation6], 0
      %s26 = sshll.u32 %s1, 4
      %s27 = int_to_ptr.hbm [resolvable:$true] %s26
      %s28 = sshll.u32 [#allocation5], 4
      %s29 = int_to_ptr.vmem [resolvable:$true] %s28
      %31 = dma.hbm_to_vmem [thread:$0]  %s27, 256, %s29, [#allocation6]
    $region9: #{tpu_custom_call.1} parent=1 // pred_fallthru
      _
    // Predicated region
    $region10: #{tpu_custom_call.1} parent=1 // pred_check
      _
    $region11: #{tpu_custom_call.1} parent=1 // pred_check_branch
      %33 = sbr.rel (0) target = $region13
    $region12: #{tpu_custom_call.1} parent=1 // pred_region
      %35 = dma.done [#allocation3], 256
    $region13: #{tpu_custom_call.1} parent=1 // pred_fallthru
      _
    // Predicated region
    $region14: #{tpu_custom_call.1} parent=1 // pred_check
      _
    $region15: #{tpu_custom_call.1} parent=1 // pred_check_branch
      %37 = sbr.rel (0) target = $region17
    $region16: #{tpu_custom_call.1} parent=1 // pred_region
      %39 = dma.done [#allocation6], 256
    $region17: #{tpu_custom_call.1} parent=1 // pred_fallthru
      _
    %v40 = vld [vmem:[#allocation2] sm:$0xff]
    %v41 = vld [vmem:[#allocation2 + $0x8] sm:$0xff]
    %v42 = vld [vmem:[#allocation5] sm:$0xff]
    %v43 = vld [vmem:[#allocation5 + $0x8] sm:$0xff]
    %v44 = vadd.f32 %v40, %v42
    %v45 = vadd.f32 %v41, %v43
    %46 = vst [vmem:[#allocation7] sm:$0xff] %v44
    %47 = vst [vmem:[#allocation7 + $0x8] sm:$0xff] %v45
    // Predicated region
    $region18: #{tpu_custom_call.1} parent=1 // pred_check
      _
    $region19: #{tpu_custom_call.1} parent=1 // pred_check_branch
      %49 = sbr.rel (0) target = $region21
    $region20: #{tpu_custom_call.1} parent=1 // pred_region
      %51 = vsyncadd [#allocation4], 0
      %s53 = sshll.u32 [#allocation7], 4
      %s54 = int_to_ptr.vmem [resolvable:$true] %s53
      %s55 = sshll.u32 %s2, 4
      %s56 = int_to_ptr.hbm [resolvable:$true] %s55
      %58 = dma.vmem_to_hbm [thread:$0]  %s54, 256, %s56, [#allocation4]
    $region21: #{tpu_custom_call.1} parent=1 // pred_fallthru
      _
    // Predicated region
    $region22: #{tpu_custom_call.1} parent=1 // pred_check
      _
    $region23: #{tpu_custom_call.1} parent=1 // pred_check_branch
      %60 = sbr.rel (0) target = $region25
    $region24: #{tpu_custom_call.1} parent=1 // pred_region
      %62 = dma.done [#allocation4], 256
    $region25: #{tpu_custom_call.1} parent=1 // pred_fallthru
      _
    %63 = vsyncpa [#allocation3], 1
    %64 = vsyncpa [#allocation6], 1
    %65 = vsyncpa [#allocation4], 1

</llo_original>
